<compile_context>
chip_gen: v6e
topology: v6e:2x2x1
jax: 0.10.0
libtpu: 0.0.40
codegen_flags: <defaults>
</compile_context>

<pallas_src>
import jax
import jax.numpy as jnp
from jax import lax
from jax.experimental import pallas as pl
from jax.experimental.pallas import tpu as pltpu

EPS = 1e-5
LANE = 128


def _fused_kernel(x_ref, w1t_ref, w2t_ref, bn1_ref, bn2_ref, o_ref, acc_ref):
    # x_ref:   (B, K)  resident input (constant index map)
    # w1t_ref: (K, tn) streamed column tile of W1^T
    # w2t_ref: (tn, N) streamed row    tile of W2^T
    # bn1_ref: (2, tn) [gamma1; beta1] tile for this step
    # bn2_ref: (2, N)  [gamma2; beta2] resident
    # o_ref:   (B, N)  resident output, written only at the last step
    # acc_ref: (B, N)  f32 scratch accumulating layer-2 pre-BN activations
    j = pl.program_id(0)

    @pl.when(j == 0)
    def _():
        acc_ref[...] = jnp.zeros_like(acc_ref)

    # ---- Layer 1, feature tile j: Linear(no bias) -> BN(train) -> ReLU ----
    x = x_ref[...]
    y = jnp.dot(x.astype(w1t_ref.dtype), w1t_ref[...],
                preferred_element_type=jnp.float32)                # (B, tn) f32
    m1 = jnp.mean(y, axis=0, keepdims=True)
    v1 = jnp.maximum(jnp.mean(y * y, axis=0, keepdims=True) - m1 * m1, 0.0)
    s1 = bn1_ref[0:1, :] * lax.rsqrt(v1 + EPS)                     # scale
    b1 = bn1_ref[1:2, :] - m1 * s1                                 # shift
    y = jnp.maximum(y * s1 + b1, 0.0)

    # ---- Layer 2 partial matmul: acc += y_tile @ W2^T[tile_j, :] ----
    acc_ref[...] += jnp.dot(y.astype(w2t_ref.dtype), w2t_ref[...],
                            preferred_element_type=jnp.float32)

    # ---- Layer 2 BN(train) + ReLU once all K tiles are accumulated ----
    @pl.when(j == pl.num_programs(0) - 1)
    def _():
        z = acc_ref[...]
        m2 = jnp.mean(z, axis=0, keepdims=True)
        v2 = jnp.maximum(jnp.mean(z * z, axis=0, keepdims=True) - m2 * m2, 0.0)
        s2 = bn2_ref[0:1, :] * lax.rsqrt(v2 + EPS)
        b2 = bn2_ref[1:2, :] - m2 * s2
        o_ref[...] = jnp.maximum(z * s2 + b2, 0.0).astype(o_ref.dtype)


def _fused_forward(x, w1t, w2t, bn1, bn2, *, tn):
    """Single fused pallas_call: Linear->BN->ReLU->Linear->BN->ReLU."""
    B, K = x.shape
    N = w1t.shape[1]
    assert w1t.shape == (K, N) and w2t.shape == (N, N)
    assert N % tn == 0
    n_tiles = N // tn
    wbytes = jnp.dtype(w1t.dtype).itemsize

    flops = 4 * B * K * N + 16 * B * N
    bytes_accessed = 4 * B * K + 2 * wbytes * K * N + 4 * 4 * N + 4 * B * N

    # VMEM footprint (conservative: assume double-buffering everywhere).
    vmem_needed = (
        2 * 4 * B * K              # resident x
        + 2 * wbytes * K * tn      # W1^T column tile
        + 2 * wbytes * tn * N      # W2^T row tile
        + 2 * 4 * 2 * tn           # bn1 tile
        + 2 * 4 * 2 * N            # bn2 resident
        + 2 * 4 * B * N            # output block
        + 4 * B * N                # accumulator scratch
    )
    vmem_limit = None
    if vmem_needed > 24 * 1024 * 1024:
        # Cap well below v7x's 64 MiB physical per-TC VMEM; leave headroom.
        vmem_limit = int(min(vmem_needed + 8 * 1024 * 1024, 48 * 1024 * 1024))

    return pl.pallas_call(
        _fused_kernel,
        out_shape=jax.ShapeDtypeStruct((B, N), jnp.float32),
        grid_spec=pltpu.PrefetchScalarGridSpec(
            num_scalar_prefetch=0,
            grid=(n_tiles,),
            in_specs=[
                pl.BlockSpec((B, K), lambda j: (0, 0)),     # x: resident
                pl.BlockSpec((K, tn), lambda j: (0, j)),    # W1^T column tile
                pl.BlockSpec((tn, N), lambda j: (j, 0)),    # W2^T row tile
                pl.BlockSpec((2, tn), lambda j: (0, j)),    # (g1, be1) tile
                pl.BlockSpec((2, N), lambda j: (0, 0)),     # (g2, be2) resident
            ],
            out_specs=pl.BlockSpec((B, N), lambda j: (0, 0)),
            scratch_shapes=[pltpu.VMEM((B, N), jnp.float32)],
        ),
        compiler_params=pltpu.CompilerParams(
            # The grid axis carries the layer-2 K reduction -> must be arbitrary.
            dimension_semantics=("arbitrary",),
            vmem_limit_bytes=vmem_limit,
        ),
        cost_estimate=pl.CostEstimate(
            flops=flops, transcendentals=2 * N, bytes_accessed=bytes_accessed
        ),
    )(x, w1t, w2t, bn1, bn2)


def prepare_params(params, weight_dtype=jnp.bfloat16):
    """One-time preprocessing: transpose + pad weights (to a lane-dense multiple
    of 128) and cast them to the streaming dtype; drop the Linear biases (they
    cancel exactly against training-mode BN mean subtraction); pack gamma/beta
    as (2, hp) arrays (padded with 0 so padded columns stay exactly zero)."""
    h = params["w1"].shape[0]
    hp = ((h + LANE - 1) // LANE) * LANE
    tn = 256 if hp % 256 == 0 else LANE          # 256 fills the v6e/v7x MXU width

    def pad_w(w):
        return jnp.pad(w.T, ((0, hp - h), (0, hp - h))).astype(weight_dtype)

    def pad_v(v):
        return jnp.pad(v.astype(jnp.float32), (0, hp - h))

    return {
        "h": h,
        "hp": hp,
        "tn": tn,
        "w1t": pad_w(params["w1"]),
        "w2t": pad_w(params["w2"]),
        "bn1": jnp.stack([pad_v(params["g1"]), pad_v(params["be1"])]),  # (2, hp)
        "bn2": jnp.stack([pad_v(params["g2"]), pad_v(params["be2"])]),  # (2, hp)
    }


def kern_module_forward(x, prep):
    """Mirrors KernModule.forward: x.view(B, h) -> layers -> view back to x.shape."""
    shp = x.shape
    B = shp[0]
    h, hp, tn = prep["h"], prep["hp"], prep["tn"]

    x2d = x.reshape(B, h).astype(jnp.float32)
    if hp != h:
        x2d = jnp.pad(x2d, ((0, 0), (0, hp - h)))   # pad features only, never batch

    z = _fused_forward(x2d, prep["w1t"], prep["w2t"], prep["bn1"], prep["bn2"], tn=tn)
    return z[:, :h].astype(x.dtype).reshape(shp)


def init_params(h, key):
    """PyTorch-default init: Linear ~ U(-1/sqrt(h), 1/sqrt(h)); BN gamma=1, beta=0."""
    k1, k2, k3, k4 = jax.random.split(key, 4)
    bound = 1.0 / jnp.sqrt(h)
    return {
        "w1": jax.random.uniform(k1, (h, h), jnp.float32, -bound, bound),
        "b1": jax.random.uniform(k2, (h,), jnp.float32, -bound, bound),
        "g1": jnp.ones((h,), jnp.float32),
        "be1": jnp.zeros((h,), jnp.float32),
        "w2": jax.random.uniform(k3, (h, h), jnp.float32, -bound, bound),
        "b2": jax.random.uniform(k4, (h,), jnp.float32, -bound, bound),
        "g2": jnp.ones((h,), jnp.float32),
        "be2": jnp.zeros((h,), jnp.float32),
    }


def _reference_exact(x2d, p):
    """Full-precision reference of the original module (with biases, training BN)."""
    y = x2d @ p["w1"].T + p["b1"]
    m = y.mean(0, keepdims=True)
    v = ((y - m) ** 2).mean(0, keepdims=True)
    y = jnp.maximum((y - m) / jnp.sqrt(v + EPS) * p["g1"] + p["be1"], 0.0)
    z = y @ p["w2"].T + p["b2"]
    m2 = z.mean(0, keepdims=True)
    v2 = ((z - m2) ** 2).mean(0, keepdims=True)
    return jnp.maximum((z - m2) / jnp.sqrt(v2 + EPS) * p["g2"] + p["be2"], 0.0)


def _reference_matched(x2d_pad, prep):
    """Pure-JAX reference mirroring the kernel math exactly (same weight dtype,
    same bias cancellation, same clamped E[y^2]-E[y]^2 variance)."""
    wd = prep["w1t"].dtype
    w1 = prep["w1t"].astype(jnp.float32)
    w2 = prep["w2t"].astype(jnp.float32)

    xq = x2d_pad.astype(wd).astype(jnp.float32)
    y = xq @ w1
    m1 = y.mean(0, keepdims=True)
    v1 = jnp.maximum((y * y).mean(0, keepdims=True) - m1 * m1, 0.0)
    s1 = prep["bn1"][0:1] * lax.rsqrt(v1 + EPS)
    y = jnp.maximum(y * s1 + (prep["bn1"][1:2] - m1 * s1), 0.0)

    yq = y.astype(wd).astype(jnp.float32)
    z = yq @ w2
    m2 = z.mean(0, keepdims=True)
    v2 = jnp.maximum((z * z).mean(0, keepdims=True) - m2 * m2, 0.0)
    s2 = prep["bn2"][0:1] * lax.rsqrt(v2 + EPS)
    z = jnp.maximum(z * s2 + (prep["bn2"][1:2] - m2 * s2), 0.0)
    return z[:, :prep["h"]]


if __name__ == "__main__":
    B, h = 8, 32
    key = jax.random.PRNGKey(0)
    kx, kp = jax.random.split(key)
    x = jax.random.normal(kx, (B, h), jnp.float32)
    params = init_params(h, kp)

    prep = prepare_params(params)            # bf16-streamed weights (recommended)
    out = kern_module_forward(x, prep)
    out = jax.block_until_ready(out)

    assert out.shape == x.shape and out.dtype == x.dtype

    # Exact check of the kernel logic against a reference using identical
    # (bf16-quantized) weights and identical BN formulation.
    x2d = x.reshape(B, h).astype(jnp.float32)
    x2d_pad = jnp.pad(x2d, ((0, 0), (0, prep["hp"] - h)))
    ref_m = _reference_matched(x2d_pad, prep)
    assert jnp.allclose(out, ref_m, atol=2e-3, rtol=2e-3), "mismatch vs matched reference"

    # Loose sanity check against the full-fp32 PyTorch-semantics reference
    # (only bf16 weight quantization separates the two).
    ref_e = _reference_exact(x2d, params)
    rel = jnp.linalg.norm(out - ref_e) / (jnp.linalg.norm(ref_e) + 1e-12)
    assert float(rel) < 0.25, f"bf16-weight deviation vs fp32 reference too large: {float(rel)}"

    print("KERNEL_OK")
</pallas_src>

<mosaic_0001>
module attributes {stable_mosaic.version = 11 : i64} {
  func.func @_fused_kernel(%arg0: i32, %arg1: memref<8x128xf32, #tpu.memory_space<vmem>>, %arg2: memref<128x128xbf16, #tpu.memory_space<vmem>>, %arg3: memref<128x128xbf16, #tpu.memory_space<vmem>>, %arg4: memref<2x128xf32, #tpu.memory_space<vmem>>, %arg5: memref<2x128xf32, #tpu.memory_space<vmem>>, %arg6: memref<8x128xf32, #tpu.memory_space<vmem>>, %arg7: memref<8x128xf32, #tpu.memory_space<vmem>>) attributes {dimension_semantics = [#tpu.dimension_semantics<arbitrary>], iteration_bounds = array<i64: 1>, scalar_prefetch = 0 : i64, scratch_operands = 1 : i64, tpu.core_type = #tpu.core_type<tc>, window_params = [{pipeline_mode = #tpu.pipeline_mode<synchronous>, transform_indices = @transform_0, window_bounds = array<i64: 8, 128>}, {transform_indices = @transform_1, window_bounds = array<i64: 128, 128>}, {transform_indices = @transform_2, window_bounds = array<i64: 128, 128>}, {transform_indices = @transform_3, window_bounds = array<i64: 2, 128>}, {pipeline_mode = #tpu.pipeline_mode<synchronous>, transform_indices = @transform_4, window_bounds = array<i64: 2, 128>}, {pipeline_mode = #tpu.pipeline_mode<synchronous>, transform_indices = @transform_5, window_bounds = array<i64: 8, 128>}]} {
    %c0_i32 = arith.constant 0 : i32
    %0 = arith.cmpi eq, %arg0, %c0_i32 : i32
    %1 = arith.extui %0 : i1 to i32
    %c0_i32_0 = arith.constant 0 : i32
    %2 = arith.cmpi ne, %1, %c0_i32_0 : i32
    scf.if %2 {
      %cst_23 = arith.constant 0.000000e+00 : f32
      %43 = vector.broadcast %cst_23 : f32 to vector<8x128xf32>
      %c0_24 = arith.constant 0 : index
      %c0_25 = arith.constant 0 : index
      %44 = vector.load %arg7[%c0_24, %c0_25] : memref<8x128xf32, #tpu.memory_space<vmem>>, vector<8x128xf32>
      tpu.vector_store %arg7[%c0_24, %c0_25], %43 {strides = array<i32>} : memref<8x128xf32, #tpu.memory_space<vmem>>, vector<8x128xf32>,
    } else {
    }
    %c0 = arith.constant 0 : index
    %c0_1 = arith.constant 0 : index
    %3 = vector.load %arg1[%c0, %c0_1] : memref<8x128xf32, #tpu.memory_space<vmem>>, vector<8x128xf32>
    %4 = arith.truncf %3 : vector<8x128xf32> to vector<8x128xbf16>
    %c0_2 = arith.constant 0 : index
    %c0_3 = arith.constant 0 : index
    %5 = vector.load %arg2[%c0_2, %c0_3] : memref<128x128xbf16, #tpu.memory_space<vmem>>, vector<128x128xbf16>
    %cst = arith.constant dense<0.000000e+00> : vector<8x128xf32>
    %6 = tpu.matmul %4, %5, %cst {dimension_numbers = #tpu.dot_dimension_numbers<[1], [0], [0], [1], [0, 0, 1, 1], [], []>} : vector<8x128xbf16>, vector<128x128xbf16>, vector<8x128xf32> -> vector<8x128xf32>
    %cst_4 = arith.constant dense<0.000000e+00> : vector<128xf32>
    %7 = vector.multi_reduction <add>, %6, %cst_4 [0] : vector<8x128xf32> to vector<128xf32>
    %8 = vector.shape_cast %7 : vector<128xf32> to vector<1x128xf32>
    %cst_5 = arith.constant 8.000000e+00 : f32
    %9 = vector.broadcast %cst_5 : f32 to vector<1x128xf32>
    %10 = arith.divf %8, %9 : vector<1x128xf32>
    %11 = arith.mulf %6, %6 : vector<8x128xf32>
    %cst_6 = arith.constant dense<0.000000e+00> : vector<128xf32>
    %12 = vector.multi_reduction <add>, %11, %cst_6 [0] : vector<8x128xf32> to vector<128xf32>
    %13 = vector.shape_cast %12 : vector<128xf32> to vector<1x128xf32>
    %cst_7 = arith.constant 8.000000e+00 : f32
    %14 = vector.broadcast %cst_7 : f32 to vector<1x128xf32>
    %15 = arith.divf %13, %14 : vector<1x128xf32>
    %16 = arith.mulf %10, %10 : vector<1x128xf32>
    %17 = arith.subf %15, %16 : vector<1x128xf32>
    %cst_8 = arith.constant 0.000000e+00 : f32
    %18 = vector.broadcast %cst_8 : f32 to vector<1x128xf32>
    %19 = arith.maximumf %17, %18 : vector<1x128xf32>
    %c0_9 = arith.constant 0 : index
    %c0_10 = arith.constant 0 : index
    %20 = vector.load %arg4[%c0_9, %c0_10] : memref<2x128xf32, #tpu.memory_space<vmem>>, vector<1x128xf32>
    %cst_11 = arith.constant 9.99999974E-6 : f32
    %21 = vector.broadcast %cst_11 : f32 to vector<1x128xf32>
    %22 = arith.addf %19, %21 : vector<1x128xf32>
    %23 = math.rsqrt %22 : vector<1x128xf32>
    %24 = arith.mulf %20, %23 : vector<1x128xf32>
    %c1 = arith.constant 1 : index
    %c0_12 = arith.constant 0 : index
    %25 = vector.load %arg4[%c1, %c0_12] : memref<2x128xf32, #tpu.memory_space<vmem>>, vector<1x128xf32>
    %26 = arith.mulf %10, %24 : vector<1x128xf32>
    %27 = arith.subf %25, %26 : vector<1x128xf32>
    %28 = vector.broadcast %24 : vector<1x128xf32> to vector<8x128xf32>
    %29 = arith.mulf %6, %28 : vector<8x128xf32>
    %30 = vector.broadcast %27 : vector<1x128xf32> to vector<8x128xf32>
    %31 = arith.addf %29, %30 : vector<8x128xf32>
    %cst_13 = arith.constant 0.000000e+00 : f32
    %32 = vector.broadcast %cst_13 : f32 to vector<8x128xf32>
    %33 = arith.maximumf %31, %32 : vector<8x128xf32>
    %c0_14 = arith.constant 0 : index
    %c0_15 = arith.constant 0 : index
    %34 = vector.load %arg7[%c0_14, %c0_15] : memref<8x128xf32, #tpu.memory_space<vmem>>, vector<8x128xf32>
    %35 = arith.truncf %33 : vector<8x128xf32> to vector<8x128xbf16>
    %c0_16 = arith.constant 0 : index
    %c0_17 = arith.constant 0 : index
    %36 = vector.load %arg3[%c0_16, %c0_17] : memref<128x128xbf16, #tpu.memory_space<vmem>>, vector<128x128xbf16>
    %cst_18 = arith.constant dense<0.000000e+00> : vector<8x128xf32>
    %37 = tpu.matmul %35, %36, %cst_18 {dimension_numbers = #tpu.dot_dimension_numbers<[1], [0], [0], [1], [0, 0, 1, 1], [], []>} : vector<8x128xbf16>, vector<128x128xbf16>, vector<8x128xf32> -> vector<8x128xf32>
    %38 = arith.addf %34, %37 : vector<8x128xf32>
    %c0_19 = arith.constant 0 : index
    %c0_20 = arith.constant 0 : index
    %39 = vector.load %arg7[%c0_19, %c0_20] : memref<8x128xf32, #tpu.memory_space<vmem>>, vector<8x128xf32>
    tpu.vector_store %arg7[%c0_19, %c0_20], %38 {strides = array<i32>} : memref<8x128xf32, #tpu.memory_space<vmem>>, vector<8x128xf32>,
    %c0_i32_21 = arith.constant 0 : i32
    %40 = arith.cmpi eq, %arg0, %c0_i32_21 : i32
    %41 = arith.extui %40 : i1 to i32
    %c0_i32_22 = arith.constant 0 : i32
    %42 = arith.cmpi ne, %41, %c0_i32_22 : i32
    scf.if %42 {
      %c0_23 = arith.constant 0 : index
      %c0_24 = arith.constant 0 : index
      %43 = vector.load %arg7[%c0_23, %c0_24] : memref<8x128xf32, #tpu.memory_space<vmem>>, vector<8x128xf32>
      %cst_25 = arith.constant dense<0.000000e+00> : vector<128xf32>
      %44 = vector.multi_reduction <add>, %43, %cst_25 [0] : vector<8x128xf32> to vector<128xf32>
      %45 = vector.shape_cast %44 : vector<128xf32> to vector<1x128xf32>
      %cst_26 = arith.constant 8.000000e+00 : f32
      %46 = vector.broadcast %cst_26 : f32 to vector<1x128xf32>
      %47 = arith.divf %45, %46 : vector<1x128xf32>
      %48 = arith.mulf %43, %43 : vector<8x128xf32>
      %cst_27 = arith.constant dense<0.000000e+00> : vector<128xf32>
      %49 = vector.multi_reduction <add>, %48, %cst_27 [0] : vector<8x128xf32> to vector<128xf32>
      %50 = vector.shape_cast %49 : vector<128xf32> to vector<1x128xf32>
      %cst_28 = arith.constant 8.000000e+00 : f32
      %51 = vector.broadcast %cst_28 : f32 to vector<1x128xf32>
      %52 = arith.divf %50, %51 : vector<1x128xf32>
      %53 = arith.mulf %47, %47 : vector<1x128xf32>
      %54 = arith.subf %52, %53 : vector<1x128xf32>
      %cst_29 = arith.constant 0.000000e+00 : f32
      %55 = vector.broadcast %cst_29 : f32 to vector<1x128xf32>
      %56 = arith.maximumf %54, %55 : vector<1x128xf32>
      %c0_30 = arith.constant 0 : index
      %c0_31 = arith.constant 0 : index
      %57 = vector.load %arg5[%c0_30, %c0_31] : memref<2x128xf32, #tpu.memory_space<vmem>>, vector<1x128xf32>
      %cst_32 = arith.constant 9.99999974E-6 : f32
      %58 = vector.broadcast %cst_32 : f32 to vector<1x128xf32>
      %59 = arith.addf %56, %58 : vector<1x128xf32>
      %60 = math.rsqrt %59 : vector<1x128xf32>
      %61 = arith.mulf %57, %60 : vector<1x128xf32>
      %c1_33 = arith.constant 1 : index
      %c0_34 = arith.constant 0 : index
      %62 = vector.load %arg5[%c1_33, %c0_34] : memref<2x128xf32, #tpu.memory_space<vmem>>, vector<1x128xf32>
      %63 = arith.mulf %47, %61 : vector<1x128xf32>
      %64 = arith.subf %62, %63 : vector<1x128xf32>
      %65 = vector.broadcast %61 : vector<1x128xf32> to vector<8x128xf32>
      %66 = arith.mulf %43, %65 : vector<8x128xf32>
      %67 = vector.broadcast %64 : vector<1x128xf32> to vector<8x128xf32>
      %68 = arith.addf %66, %67 : vector<8x128xf32>
      %cst_35 = arith.constant 0.000000e+00 : f32
      %69 = vector.broadcast %cst_35 : f32 to vector<8x128xf32>
      %70 = arith.maximumf %68, %69 : vector<8x128xf32>
      %c0_36 = arith.constant 0 : index
      %c0_37 = arith.constant 0 : index
      %71 = vector.load %arg6[%c0_36, %c0_37] : memref<8x128xf32, #tpu.memory_space<vmem>>, vector<8x128xf32>
      tpu.vector_store %arg6[%c0_36, %c0_37], %70 {strides = array<i32>} : memref<8x128xf32, #tpu.memory_space<vmem>>, vector<8x128xf32>,
    } else {
    }
    return
  }
  func.func @transform_0(%arg0: i32) -> (i32, i32) {
    %c0_i32 = arith.constant 0 : i32
    %c0_i32_0 = arith.constant 0 : i32
    %c0_i32_1 = arith.constant 0 : i32
    return %c0_i32, %c0_i32_0 : i32, i32
  }
  func.func @transform_1(%arg0: i32) -> (i32, i32) {
    %c0_i32 = arith.constant 0 : i32
    %c0_i32_0 = arith.constant 0 : i32
    return %c0_i32, %arg0 : i32, i32
  }
  func.func @transform_2(%arg0: i32) -> (i32, i32) {
    %c0_i32 = arith.constant 0 : i32
    %c0_i32_0 = arith.constant 0 : i32
    return %arg0, %c0_i32 : i32, i32
  }
  func.func @transform_3(%arg0: i32) -> (i32, i32) {
    %c0_i32 = arith.constant 0 : i32
    %c0_i32_0 = arith.constant 0 : i32
    return %c0_i32, %arg0 : i32, i32
  }
  func.func @transform_4(%arg0: i32) -> (i32, i32) {
    %c0_i32 = arith.constant 0 : i32
    %c0_i32_0 = arith.constant 0 : i32
    %c0_i32_1 = arith.constant 0 : i32
    return %c0_i32, %c0_i32_0 : i32, i32
  }
  func.func @transform_5(%arg0: i32) -> (i32, i32) {
    %c0_i32 = arith.constant 0 : i32
    %c0_i32_0 = arith.constant 0 : i32
    %c0_i32_1 = arith.constant 0 : i32
    return %c0_i32, %c0_i32_0 : i32, i32
  }
}

</mosaic_0001>

<llo_original>
// kernel: tpu_custom_call.1
$region0: #{tpu_custom_call.1}
  #allocation0 [shape = 'u32[]', space=smem, size = 0x4, offset = 0x4, fixed_abs, tag = 'smem constant byte address 0x4 - core index']
  #allocation1 [shape = 'u32[144,128]{1,0:T(1,128)}', space=vmem, size = 0x12000, scoped, tag = 'internal scratch']
  #allocation2 [shape = 'f32[8,128]{1,0:T(8,128)}', space=vmem, size = 0x1000, scoped, tag = 'scratch operand']
  %s0 = inlined_call_operand.hbm [shape: f32[8,128], index: 0, kind: input, shape index: {}]
  %s1 = inlined_call_operand.hbm [shape: bf16[128,128], index: 1, kind: input, shape index: {}]
  %s2 = inlined_call_operand.hbm [shape: bf16[128,128], index: 2, kind: input, shape index: {}]
  %s3 = inlined_call_operand.vmem [shape: f32[2,128], index: 3, kind: input, shape index: {}]
  %s4 = inlined_call_operand.vmem [shape: f32[2,128], index: 4, kind: input, shape index: {}]
  %s5 = inlined_call_operand.hbm [shape: f32[8,128], index: 5, kind: output, shape index: {}]
  %s6 = sld [smem:[#allocation0]]
  $region50: #{tpu_custom_call.1} parent=0
    _
  %s8 = ssub.s32 1, %s6
  %s9 = scalar_select 0, %s8, %s6
  $region1: #{tpu_custom_call.1} parent=0
    #allocation3 [shape = 'u8[4096]{0}', space=vmem, size = 0x1000, scoped, tag = 'input window, operand 0, single buffered']
    #allocation4 [shape = 's32[1]{0}', space=sflag, size = 0x4, scoped, tag = 'scoped memory for tpu_custom_call.1']
    #allocation5 [shape = 's32[1]{0}', space=sflag, size = 0x4, scoped, tag = 'scoped memory for tpu_custom_call.1']
    #allocation6 [shape = 'u8[32768]{0}', space=vmem, size = 0x8000, scoped, tag = 'input window, operand 1, single buffered']
    #allocation7 [shape = 's32[1]{0}', space=sflag, size = 0x4, scoped, tag = 'scoped memory for tpu_custom_call.1']
    #allocation8 [shape = 'u8[32768]{0}', space=vmem, size = 0x8000, scoped, tag = 'input window, operand 2, single buffered']
    #allocation9 [shape = 'u8[4096]{0}', space=vmem, size = 0x1000, scoped, tag = 'output window, operand 0, single buffered']
    %10 = vsyncpa [#allocation4], 0
    %11 = vsyncpa [#allocation7], 0
    %12 = vsyncpa [#allocation5], 0
    // Predicated region
    $region2: #{tpu_custom_call.1} parent=1 // pred_check
      _
    $region3: #{tpu_custom_call.1} parent=1 // pred_check_branch
      %14 = sbr.rel (0) target = $region5
    $region4: #{tpu_custom_call.1} parent=1 // pred_region
      %s16 = ssub.s32 128, 128
      %17 = vsyncadd [#allocation4], %s16
      %s19 = sshll.u32 [#allocation3], 4
      %s20 = int_to_ptr.vmem [resolvable:$true] %s19
      %22 = dma.hbm_to_vmem [thread:$0]  %s0, 128, %s20, [#allocation4]
    $region5: #{tpu_custom_call.1} parent=1 // pred_fallthru
      _
    // Predicated region
    $region6: #{tpu_custom_call.1} parent=1 // pred_check
      _
    $region7: #{tpu_custom_call.1} parent=1 // pred_check_branch
      %24 = sbr.rel (0) target = $region9
    $region8: #{tpu_custom_call.1} parent=1 // pred_region
      %s26 = ssub.s32 1024, 1024
      %27 = vsyncadd [#allocation7], %s26
      %s28 = sshll.u32 [#allocation6], 4
      %s29 = int_to_ptr.vmem [resolvable:$true] %s28
      %34 = dma.hbm_to_vmem [thread:$0]  %s1, 1024, %s29, [#allocation7], 64, 64, 4
    $region9: #{tpu_custom_call.1} parent=1 // pred_fallthru
      _
    // Predicated region
    $region10: #{tpu_custom_call.1} parent=1 // pred_check
      _
    $region11: #{tpu_custom_call.1} parent=1 // pred_check_branch
      %36 = sbr.rel (0) target = $region13
    $region12: #{tpu_custom_call.1} parent=1 // pred_region
      %s38 = ssub.s32 1024, 1024
      %39 = vsyncadd [#allocation7], %s38
      %s40 = sshll.u32 [#allocation8], 4
      %s41 = int_to_ptr.vmem [resolvable:$true] %s40
      %46 = dma.hbm_to_vmem [thread:$0]  %s2, 1024, %s41, [#allocation7], 64, 64, 4
    $region13: #{tpu_custom_call.1} parent=1 // pred_fallthru
      _
    // Predicated region
    $region14: #{tpu_custom_call.1} parent=1 // pred_check
      _
    $region15: #{tpu_custom_call.1} parent=1 // pred_check_branch
      %48 = sbr.rel (0) target = $region17
    $region16: #{tpu_custom_call.1} parent=1 // pred_region
      _
    $region17: #{tpu_custom_call.1} parent=1 // pred_fallthru
      _
    // Predicated region
    $region18: #{tpu_custom_call.1} parent=1 // pred_check
      _
    $region19: #{tpu_custom_call.1} parent=1 // pred_check_branch
      %50 = sbr.rel (0) target = $region21
    $region20: #{tpu_custom_call.1} parent=1 // pred_region
      _
    $region21: #{tpu_custom_call.1} parent=1 // pred_fallthru
      _
    // Predicated region
    $region22: #{tpu_custom_call.1} parent=1 // pred_check
      _
    $region23: #{tpu_custom_call.1} parent=1 // pred_check_branch
      %52 = sbr.rel (0) target = $region25
    $region24: #{tpu_custom_call.1} parent=1 // pred_region
      %53 = dma.done [#allocation4], 128
    $region25: #{tpu_custom_call.1} parent=1 // pred_fallthru
      _
    // Predicated region
    $region26: #{tpu_custom_call.1} parent=1 // pred_check
      _
    $region27: #{tpu_custom_call.1} parent=1 // pred_check_branch
      %55 = sbr.rel (0) target = $region29
    $region28: #{tpu_custom_call.1} parent=1 // pred_region
      %56 = dma.done [#allocation7], 1024
    $region29: #{tpu_custom_call.1} parent=1 // pred_fallthru
      _
    // Predicated region
    $region30: #{tpu_custom_call.1} parent=1 // pred_check
      _
    $region31: #{tpu_custom_call.1} parent=1 // pred_check_branch
      %58 = sbr.rel (0) target = $region33
    $region32: #{tpu_custom_call.1} parent=1 // pred_region
      %59 = dma.done [#allocation7], 1024
    $region33: #{tpu_custom_call.1} parent=1 // pred_fallthru
      _
    %p61 = scmp.eq.s32.totalorder 0, 0
    // Predicated region
    $region34: #{tpu_custom_call.1} parent=1 // pred_check
      %p62 = pneg %p61
    $region35: #{tpu_custom_call.1} parent=1 // pred_check_branch
      %64 = sbr.rel (%p62) target = $region37
    $region36: #{tpu_custom_call.1} parent=1 // pred_region
      %65 = vst [vmem:[#allocation2] sm:$0xff] 0.0
    $region37: #{tpu_custom_call.1} parent=1 // pred_fallthru
      _
    %v66 = vld [vmem:[#allocation3] sm:$0xff]
    %v67 = vpack.c.bf16 %v66, %v66
    %v68 = vld [vmem:[#allocation6] sm:$0xf]
    %v69 = vld [vmem:[#allocation6 + $0x4] sm:$0xf]
    %v70 = vld [vmem:[#allocation6 + $0x8] sm:$0xf]
    %v71 = vld [vmem:[#allocation6 + $0xc] sm:$0xf]
    %v72 = vld [vmem:[#allocation6 + $0x10] sm:$0xf]
    %v73 = vld [vmem:[#allocation6 + $0x14] sm:$0xf]
    %v74 = vld [vmem:[#allocation6 + $0x18] sm:$0xf]
    %v75 = vld [vmem:[#allocation6 + $0x1c] sm:$0xf]
    %v76 = vld [vmem:[#allocation6 + $0x20] sm:$0xf]
    %v77 = vld [vmem:[#allocation6 + $0x24] sm:$0xf]
    %v78 = vld [vmem:[#allocation6 + $0x28] sm:$0xf]
    %v79 = vld [vmem:[#allocation6 + $0x2c] sm:$0xf]
    %v80 = vld [vmem:[#allocation6 + $0x30] sm:$0xf]
    %v81 = vld [vmem:[#allocation6 + $0x34] sm:$0xf]
    %v82 = vld [vmem:[#allocation6 + $0x38] sm:$0xf]
    %v83 = vld [vmem:[#allocation6 + $0x3c] sm:$0xf]
    %v100 = vunpack.c.l.b16 %v68
    %v101 = vunpack.c.l.b16 %v69
    %v102 = vunpack.c.l.b16 %v70
    %v103 = vunpack.c.l.b16 %v71
    %v104 = vunpack.c.l.b16 %v72
    %v105 = vunpack.c.l.b16 %v73
    %v106 = vunpack.c.l.b16 %v74
    %v107 = vunpack.c.l.b16 %v75
    %v108 = vunpack.c.l.b16 %v76
    %v109 = vunpack.c.l.b16 %v77
    %v110 = vunpack.c.l.b16 %v78
    %v111 = vunpack.c.l.b16 %v79
    %v112 = vunpack.c.l.b16 %v80
    %v113 = vunpack.c.l.b16 %v81
    %v114 = vunpack.c.l.b16 %v82
    %v115 = vunpack.c.l.b16 %v83
    %v116 = vpack.c.b16 %v101, %v100
    %v117 = vpack.c.b16 %v103, %v102
    %v118 = vpack.c.b16 %v105, %v104
    %v119 = vpack.c.b16 %v107, %v106
    %v120 = vpack.c.b16 %v109, %v108
    %v121 = vpack.c.b16 %v111, %v110
    %v122 = vpack.c.b16 %v113, %v112
    %v123 = vpack.c.b16 %v115, %v114
    %132 = vmatprep.subr.bf16.mxu0 0
    %133 = vmatpush1.bf16.msra.mxu0 %v123
    %134 = vmatprep.subr.bf16.mxu0 0
    %135 = vmatpush1.bf16.msra.mxu0 %v122
    %136 = vmatprep.subr.bf16.mxu0 0
    %137 = vmatpush1.bf16.msra.mxu0 %v121
    %138 = vmatprep.subr.bf16.mxu0 0
    %139 = vmatpush1.bf16.msra.mxu0 %v120
    %140 = vmatprep.subr.bf16.mxu0 0
    %141 = vmatpush1.bf16.msra.mxu0 %v119
    %142 = vmatprep.subr.bf16.mxu0 0
    %143 = vmatpush1.bf16.msra.mxu0 %v118
    %144 = vmatprep.subr.bf16.mxu0 0
    %145 = vmatpush1.bf16.msra.mxu0 %v117
    %146 = vmatprep.subr.bf16.mxu0 0
    %147 = vmatpush1.bf16.msra.mxu0 %v116
    %148 = vmatprep.subr.bf16.mxu0 0
    %149 = vmatpush2.bf16.msra.mxu0 0
    %150 = vmatprep.subr.bf16.mxu0 0
    %151 = vmatpush2.bf16.msra.mxu0 0
    %152 = vmatprep.subr.bf16.mxu0 0
    %153 = vmatpush2.bf16.msra.mxu0 0
    %154 = vmatprep.subr.bf16.mxu0 0
    %155 = vmatpush2.bf16.msra.mxu0 0
    %156 = vmatprep.subr.bf16.mxu0 0
    %157 = vmatpush2.bf16.msra.mxu0 0
    %158 = vmatprep.subr.bf16.mxu0 0
    %159 = vmatpush2.bf16.msra.mxu0 0
    %160 = vmatprep.subr.bf16.mxu0 0
    %161 = vmatpush2.bf16.msra.mxu0 0
    %162 = vmatprep.subr.bf16.mxu0 0
    %163 = vmatpush2.bf16.msra.mxu0 0
    %164 = vmatprep.mubr.bf16.mxu0 0
    %165 = vmatmul.mubr.bf16.gmra.mxu0 %v67
    %v166 = vpop.f32.mrf.mxu0
    %v167 = vadd.f32 0.0, %v166
    %v168 = vpop.f32.mrf.mxu0
    %v169 = vpop.f32.mrf.mxu0
    %v170 = vpop.f32.mrf.mxu0
    %171 = vdwg.mxu0
    %v172 = vrot.slane %v167, 4
    %v173 = vadd.f32 %v167, %v172
    %v174 = vrot.slane %v173, 2
    %v175 = vadd.f32 %v173, %v174
    %v176 = vrot.slane %v175, 1
    %v177 = vadd.f32 %v175, %v176
    %v178 = vrcp.pop 8.0
    %v179 = vmul.f32 %v177, %v178
    %v180 = vmul.f32 %v167, %v167
    %v181 = vrot.slane %v180, 4
    %v182 = vadd.f32 %v180, %v181
    %v183 = vrot.slane %v182, 2
    %v184 = vadd.f32 %v182, %v183
    %v185 = vrot.slane %v184, 1
    %v186 = vadd.f32 %v184, %v185
    %v187 = vmul.f32 %v186, %v178
    %v188 = vmul.f32 %v179, %v179
    %v189 = vsub.f32 %v187, %v188
    %v190 = vmax.f32 %v189, 0.0
    %v191 = vld [vmem:[%s3] sm:$0x1]
    %v192 = vadd.f32 %v190, 1e-05
    %v193 = vrsqrt.pop %v192
    %v194 = vmul.f32 %v191, %v193
    %v195 = vld [vmem:[%s3 + $0x1] sm:$0x1]
    %v196 = vmul.f32 %v179, %v194
    %v197 = vsub.f32 %v195, %v196
    %v198 = vlaneseq
    %v199 = vshrl.u32 %v198, 7
    %v200 = vsub.s32 0, %v199
    %v201 = vrot.slane %v194, %v200
    %v202 = vmul.f32 %v167, %v201
    %v203 = vlaneseq
    %v204 = vshrl.u32 %v203, 7
    %v205 = vsub.s32 0, %v204
    %v206 = vrot.slane %v197, %v205
    %v207 = vadd.f32 %v202, %v206
    %v208 = vmax.f32 %v207, 0.0
    %v209 = vld [vmem:[#allocation2] sm:$0xff]
    %v210 = vpack.c.bf16 %v208, %v208
    %v211 = vld [vmem:[#allocation8] sm:$0xf]
    %v212 = vld [vmem:[#allocation8 + $0x4] sm:$0xf]
    %v213 = vld [vmem:[#allocation8 + $0x8] sm:$0xf]
    %v214 = vld [vmem:[#allocation8 + $0xc] sm:$0xf]
    %v215 = vld [vmem:[#allocation8 + $0x10] sm:$0xf]
    %v216 = vld [vmem:[#allocation8 + $0x14] sm:$0xf]
    %v217 = vld [vmem:[#allocation8 + $0x18] sm:$0xf]
    %v218 = vld [vmem:[#allocation8 + $0x1c] sm:$0xf]
    %v219 = vld [vmem:[#allocation8 + $0x20] sm:$0xf]
    %v220 = vld [vmem:[#allocation8 + $0x24] sm:$0xf]
    %v221 = vld [vmem:[#allocation8 + $0x28] sm:$0xf]
    %v222 = vld [vmem:[#allocation8 + $0x2c] sm:$0xf]
    %v223 = vld [vmem:[#allocation8 + $0x30] sm:$0xf]
    %v224 = vld [vmem:[#allocation8 + $0x34] sm:$0xf]
    %v225 = vld [vmem:[#allocation8 + $0x38] sm:$0xf]
    %v226 = vld [vmem:[#allocation8 + $0x3c] sm:$0xf]
    %v243 = vunpack.c.l.b16 %v211
    %v244 = vunpack.c.l.b16 %v212
    %v245 = vunpack.c.l.b16 %v213
    %v246 = vunpack.c.l.b16 %v214
    %v247 = vunpack.c.l.b16 %v215
    %v248 = vunpack.c.l.b16 %v216
    %v249 = vunpack.c.l.b16 %v217
    %v250 = vunpack.c.l.b16 %v218
    %v251 = vunpack.c.l.b16 %v219
    %v252 = vunpack.c.l.b16 %v220
    %v253 = vunpack.c.l.b16 %v221
    %v254 = vunpack.c.l.b16 %v222
    %v255 = vunpack.c.l.b16 %v223
    %v256 = vunpack.c.l.b16 %v224
    %v257 = vunpack.c.l.b16 %v225
    %v258 = vunpack.c.l.b16 %v226
    %v259 = vpack.c.b16 %v244, %v243
    %v260 = vpack.c.b16 %v246, %v245
    %v261 = vpack.c.b16 %v248, %v247
    %v262 = vpack.c.b16 %v250, %v249
    %v263 = vpack.c.b16 %v252, %v251
    %v264 = vpack.c.b16 %v254, %v253
    %v265 = vpack.c.b16 %v256, %v255
    %v266 = vpack.c.b16 %v258, %v257
    %275 = vmatprep.subr.bf16.mxu0 0
    %276 = vmatpush1.bf16.msra.mxu0 %v266
    %277 = vmatprep.subr.bf16.mxu0 0
    %278 = vmatpush1.bf16.msra.mxu0 %v265
    %279 = vmatprep.subr.bf16.mxu0 0
    %280 = vmatpush1.bf16.msra.mxu0 %v264
    %281 = vmatprep.subr.bf16.mxu0 0
    %282 = vmatpush1.bf16.msra.mxu0 %v263
    %283 = vmatprep.subr.bf16.mxu0 0
    %284 = vmatpush1.bf16.msra.mxu0 %v262
    %285 = vmatprep.subr.bf16.mxu0 0
    %286 = vmatpush1.bf16.msra.mxu0 %v261
    %287 = vmatprep.subr.bf16.mxu0 0
    %288 = vmatpush1.bf16.msra.mxu0 %v260
    %289 = vmatprep.subr.bf16.mxu0 0
    %290 = vmatpush1.bf16.msra.mxu0 %v259
    %291 = vmatprep.subr.bf16.mxu0 0
    %292 = vmatpush2.bf16.msra.mxu0 0
    %293 = vmatprep.subr.bf16.mxu0 0
    %294 = vmatpush2.bf16.msra.mxu0 0
    %295 = vmatprep.subr.bf16.mxu0 0
    %296 = vmatpush2.bf16.msra.mxu0 0
    %297 = vmatprep.subr.bf16.mxu0 0
    %298 = vmatpush2.bf16.msra.mxu0 0
    %299 = vmatprep.subr.bf16.mxu0 0
    %300 = vmatpush2.bf16.msra.mxu0 0
    %301 = vmatprep.subr.bf16.mxu0 0
    %302 = vmatpush2.bf16.msra.mxu0 0
    %303 = vmatprep.subr.bf16.mxu0 0
    %304 = vmatpush2.bf16.msra.mxu0 0
    %305 = vmatprep.subr.bf16.mxu0 0
    %306 = vmatpush2.bf16.msra.mxu0 0
    %307 = vmatprep.mubr.bf16.mxu0 0
    %308 = vmatmul.mubr.bf16.gmra.mxu0 %v210
    %v309 = vpop.f32.mrf.mxu0
    %v310 = vadd.f32 0.0, %v309
    %v311 = vpop.f32.mrf.mxu0
    %v312 = vpop.f32.mrf.mxu0
    %v313 = vpop.f32.mrf.mxu0
    %314 = vdwg.mxu0
    %v315 = vadd.f32 %v209, %v310
    %316 = vst [vmem:[#allocation2] sm:$0xff] %v315
    // Predicated region
    $region38: #{tpu_custom_call.1} parent=1 // pred_check
      %p317 = pneg %p61
    $region39: #{tpu_custom_call.1} parent=1 // pred_check_branch
      %319 = sbr.rel (%p317) target = $region41
    $region40: #{tpu_custom_call.1} parent=1 // pred_region
      %v320 = vld [vmem:[#allocation2] sm:$0xff]
      %v321 = vrot.slane %v320, 4
      %v322 = vadd.f32 %v320, %v321
      %v323 = vrot.slane %v322, 2
      %v324 = vadd.f32 %v322, %v323
      %v325 = vrot.slane %v324, 1
      %v326 = vadd.f32 %v324, %v325
      %v327 = vmul.f32 %v326, %v178
      %v328 = vmul.f32 %v320, %v320
      %v329 = vrot.slane %v328, 4
      %v330 = vadd.f32 %v328, %v329
      %v331 = vrot.slane %v330, 2
      %v332 = vadd.f32 %v330, %v331
      %v333 = vrot.slane %v332, 1
      %v334 = vadd.f32 %v332, %v333
      %v335 = vmul.f32 %v334, %v178
      %v336 = vmul.f32 %v327, %v327
      %v337 = vsub.f32 %v335, %v336
      %v338 = vmax.f32 %v337, 0.0
      %v339 = vld [vmem:[%s4] sm:$0x1]
      %v340 = vadd.f32 %v338, 1e-05
      %v341 = vrsqrt.pop %v340
      %v342 = vmul.f32 %v339, %v341
      %v343 = vld [vmem:[%s4 + $0x1] sm:$0x1]
      %v344 = vmul.f32 %v327, %v342
      %v345 = vsub.f32 %v343, %v344
      %v346 = vlaneseq
      %v347 = vshrl.u32 %v346, 7
      %v348 = vsub.s32 0, %v347
      %v349 = vrot.slane %v342, %v348
      %v350 = vmul.f32 %v320, %v349
      %v351 = vlaneseq
      %v352 = vshrl.u32 %v351, 7
      %v353 = vsub.s32 0, %v352
      %v354 = vrot.slane %v345, %v353
      %v355 = vadd.f32 %v350, %v354
      %v356 = vmax.f32 %v355, 0.0
      %357 = vst [vmem:[#allocation9] sm:$0xff] %v356
    $region41: #{tpu_custom_call.1} parent=1 // pred_fallthru
      _
    // Predicated region
    $region42: #{tpu_custom_call.1} parent=1 // pred_check
      _
    $region43: #{tpu_custom_call.1} parent=1 // pred_check_branch
      %359 = sbr.rel (0) target = $region45
    $region44: #{tpu_custom_call.1} parent=1 // pred_region
      %s361 = ssub.s32 128, 128
      %362 = vsyncadd [#allocation5], %s361
      %s364 = sshll.u32 [#allocation9], 4
      %s365 = int_to_ptr.vmem [resolvable:$true] %s364
      %367 = dma.vmem_to_hbm [thread:$0]  %s365, 128, %s5, [#allocation5]
    $region45: #{tpu_custom_call.1} parent=1 // pred_fallthru
      _
    // Predicated region
    $region46: #{tpu_custom_call.1} parent=1 // pred_check
      _
    $region47: #{tpu_custom_call.1} parent=1 // pred_check_branch
      %369 = sbr.rel (0) target = $region49
    $region48: #{tpu_custom_call.1} parent=1 // pred_region
      %370 = dma.done [#allocation5], 128
    $region49: #{tpu_custom_call.1} parent=1 // pred_fallthru
      _
    %371 = vsyncpa [#allocation4], 1
    %372 = vsyncpa [#allocation7], 1
    %373 = vsyncpa [#allocation5], 1

</llo_original>
